<compile_context>
chip_gen: v7x
topology: tpu7x:2x2x1
jax: 0.10.0
libtpu: 0.0.40
codegen_flags: <defaults>
</compile_context>

<pallas_src>
import functools

import jax
import jax.numpy as jnp
from jax import lax
from jax.experimental import pallas as pl
from jax.experimental.pallas import tpu as pltpu


# ---------------------------------------------------------------------------
# Kernels
# ---------------------------------------------------------------------------
def _gram_kernel(f_ref, g_ref, acc_ref, *, inv_norm):
    k = pl.program_id(0)

    @pl.when(k == 0)
    def _():
        acc_ref[...] = jnp.zeros_like(acc_ref)

    f = f_ref[...]  # (Mp, tk), native dtype straight onto the MXU
    # Gram update: contract the lane (spatial) axis of f against itself.
    # dot_general with contracting dims (1, 1) == f @ f.T with no transpose.
    acc_ref[...] += lax.dot_general(
        f, f, (((1,), (1,)), ((), ())), preferred_element_type=jnp.float32
    )

    @pl.when(k == pl.num_programs(0) - 1)
    def _():
        g_ref[...] = (acc_ref[...] * inv_norm).astype(g_ref.dtype)


def _gram_mse_kernel(f_ref, t_ref, g_ref, loss_ref, acc_ref, *, inv_norm,
                     inv_mse_denom):
    k = pl.program_id(0)

    @pl.when(k == 0)
    def _():
        acc_ref[...] = jnp.zeros_like(acc_ref)

    f = f_ref[...]  # (Mp, tk), native dtype straight onto the MXU
    acc_ref[...] += lax.dot_general(
        f, f, (((1,), (1,)), ((), ())), preferred_element_type=jnp.float32
    )

    @pl.when(k == pl.num_programs(0) - 1)
    def _():
        G = acc_ref[...] * inv_norm
        g_ref[...] = G.astype(g_ref.dtype)
        diff = G - t_ref[...]
        # Padded rows/cols are zero in both G and the zero-padded target, so
        # the padded sum of squares equals the true (M, M) sum of squares;
        # normalize by the true element count.
        loss_ref[...] = jnp.sum(diff * diff, keepdims=True) * inv_mse_denom


# ---------------------------------------------------------------------------
# Wrappers
# ---------------------------------------------------------------------------
def _round_up(x, m):
    return ((x + m - 1) // m) * m


def _pad2d(a, rows, cols):
    r, c = a.shape
    if (r, c) == (rows, cols):
        return a
    return jnp.pad(a, ((0, rows - r), (0, cols - c)))


def _features(x):
    b, c, h, w = x.shape
    return x.reshape(b * c, h * w), float(b * c * h * w)


def _choose_tiles(M, K, itemsize):
    LANE = 128
    # Lane-dense M: zero rows are exact for a Gram matrix.
    Mp = _round_up(M, LANE)
    # K tile: as fat as a ~4 MiB (per buffer) (Mp, tk) feature slab allows so
    # per-step accumulator RMW and pipeline overhead (~0.35 us/step) amortize.
    budget_bytes = 4 * 1024 * 1024
    tk = max(LANE, min(4096, (budget_bytes // (Mp * itemsize)) // LANE * LANE))
    K_lane = _round_up(K, LANE)
    if K_lane <= tk:
        tk = K_lane  # single reduction step: no pipeline at all
    Kp = _round_up(K, tk)
    return Mp, Kp, tk


def gram_matrix(x):
    """Pallas equivalent of StyleLoss._gram_matrix (used for the target)."""
    f, norm = _features(x)
    M, K = f.shape
    Mp, Kp, tk = _choose_tiles(M, K, jnp.dtype(x.dtype).itemsize)
    fp = _pad2d(f, Mp, Kp)

    Gp = pl.pallas_call(
        functools.partial(_gram_kernel, inv_norm=1.0 / norm),
        out_shape=jax.ShapeDtypeStruct((Mp, Mp), jnp.float32),
        grid_spec=pltpu.PrefetchScalarGridSpec(
            num_scalar_prefetch=0,
            grid=(Kp // tk,),
            in_specs=[pl.BlockSpec((Mp, tk), lambda k: (0, k))],
            out_specs=pl.BlockSpec((Mp, Mp), lambda k: (0, 0)),
            scratch_shapes=[pltpu.VMEM((Mp, Mp), jnp.float32)],
        ),
        compiler_params=pltpu.CompilerParams(
            dimension_semantics=("arbitrary",)),
    )(fp)
    return Gp[:M, :M]


def style_loss_forward(x, target_G):
    """Mirrors StyleLoss.forward: returns x unchanged, plus the MSE style loss
    (PyTorch stores it as self.loss) and the Gram matrix of x."""
    f, norm = _features(x)
    M, K = f.shape
    Mp, Kp, tk = _choose_tiles(M, K, jnp.dtype(x.dtype).itemsize)
    fp = _pad2d(f, Mp, Kp)
    tgt = _pad2d(target_G.astype(jnp.float32), Mp, Mp)

    Gp, loss = pl.pallas_call(
        functools.partial(_gram_mse_kernel, inv_norm=1.0 / norm,
                          inv_mse_denom=1.0 / float(M * M)),
        out_shape=(
            jax.ShapeDtypeStruct((Mp, Mp), jnp.float32),
            jax.ShapeDtypeStruct((1, 1), jnp.float32),
        ),
        grid_spec=pltpu.PrefetchScalarGridSpec(
            num_scalar_prefetch=0,
            grid=(Kp // tk,),
            in_specs=[
                pl.BlockSpec((Mp, tk), lambda k: (0, k)),
                pl.BlockSpec((Mp, Mp), lambda k: (0, 0)),
            ],
            out_specs=[
                pl.BlockSpec((Mp, Mp), lambda k: (0, 0)),
                pl.BlockSpec((1, 1), lambda k: (0, 0)),
            ],
            scratch_shapes=[pltpu.VMEM((Mp, Mp), jnp.float32)],
        ),
        compiler_params=pltpu.CompilerParams(
            dimension_semantics=("arbitrary",)),
    )(fp, tgt)
    return x, loss[0, 0], Gp[:M, :M]


# ---------------------------------------------------------------------------
# Demo / correctness check
# ---------------------------------------------------------------------------
def _gram_ref(v):
    b, c, h, w = v.shape
    ff = v.reshape(b * c, h * w).astype(jnp.float32)
    return (ff @ ff.T) / (b * c * h * w)


if __name__ == "__main__":
    key = jax.random.PRNGKey(0)
    k_t, k_x = jax.random.split(key)

    # StyleLoss.__init__(target_feature): the target Gram matrix is precomputed.
    target_feature = jax.random.normal(k_t, (2, 4, 16, 16), dtype=jnp.float32)
    x = jax.random.normal(k_x, (2, 4, 16, 16), dtype=jnp.float32)

    target_G = gram_matrix(target_feature)
    x_out, loss, G = style_loss_forward(x, target_G)
    jax.block_until_ready((x_out, loss, G, target_G))

    # Reference check in plain JAX.
    G_ref = _gram_ref(x)
    T_ref = _gram_ref(target_feature)
    loss_ref = jnp.mean((G_ref - T_ref) ** 2)
    assert jnp.allclose(target_G, T_ref, atol=1e-5, rtol=1e-5)
    assert jnp.allclose(G, G_ref, atol=1e-5, rtol=1e-5)
    assert jnp.allclose(loss, loss_ref, atol=1e-5, rtol=1e-5)
    assert jnp.array_equal(x_out, x)  # forward() returns its input unchanged

    print("KERNEL_OK")
</pallas_src>

<mosaic_0001>
module attributes {stable_mosaic.version = 11 : i64} {
  func.func @_gram_kernel(%arg0: i32, %arg1: memref<128x256xf32, #tpu.memory_space<vmem>>, %arg2: memref<128x128xf32, #tpu.memory_space<vmem>>, %arg3: memref<128x128xf32, #tpu.memory_space<vmem>>) attributes {dimension_semantics = [#tpu.dimension_semantics<arbitrary>], iteration_bounds = array<i64: 1>, scalar_prefetch = 0 : i64, scratch_operands = 1 : i64, tpu.core_type = #tpu.core_type<tc>, window_params = [{transform_indices = @transform_0, window_bounds = array<i64: 128, 256>}, {pipeline_mode = #tpu.pipeline_mode<synchronous>, transform_indices = @transform_1, window_bounds = array<i64: 128, 128>}]} {
    %c0_i32 = arith.constant 0 : i32
    %0 = arith.cmpi eq, %arg0, %c0_i32 : i32
    %1 = arith.extui %0 : i1 to i32
    %c0_i32_0 = arith.constant 0 : i32
    %2 = arith.cmpi ne, %1, %c0_i32_0 : i32
    scf.if %2 {
      %cst_8 = arith.constant 0.000000e+00 : f32
      %11 = vector.broadcast %cst_8 : f32 to vector<128x128xf32>
      %c0_9 = arith.constant 0 : index
      %c0_10 = arith.constant 0 : index
      %12 = vector.load %arg3[%c0_9, %c0_10] : memref<128x128xf32, #tpu.memory_space<vmem>>, vector<128x128xf32>
      tpu.vector_store %arg3[%c0_9, %c0_10], %11 {strides = array<i32>} : memref<128x128xf32, #tpu.memory_space<vmem>>, vector<128x128xf32>,
    } else {
    }
    %c0 = arith.constant 0 : index
    %c0_1 = arith.constant 0 : index
    %3 = vector.load %arg1[%c0, %c0_1] : memref<128x256xf32, #tpu.memory_space<vmem>>, vector<128x256xf32>
    %c0_2 = arith.constant 0 : index
    %c0_3 = arith.constant 0 : index
    %4 = vector.load %arg3[%c0_2, %c0_3] : memref<128x128xf32, #tpu.memory_space<vmem>>, vector<128x128xf32>
    %cst = arith.constant dense<0.000000e+00> : vector<128x128xf32>
    %5 = tpu.matmul %3, %3, %cst {dimension_numbers = #tpu.dot_dimension_numbers<[1], [1], [0], [0], [0, 0, 1, 0], [], []>} : vector<128x256xf32>, vector<128x256xf32>, vector<128x128xf32> -> vector<128x128xf32>
    %6 = arith.addf %4, %5 : vector<128x128xf32>
    %c0_4 = arith.constant 0 : index
    %c0_5 = arith.constant 0 : index
    %7 = vector.load %arg3[%c0_4, %c0_5] : memref<128x128xf32, #tpu.memory_space<vmem>>, vector<128x128xf32>
    tpu.vector_store %arg3[%c0_4, %c0_5], %6 {strides = array<i32>} : memref<128x128xf32, #tpu.memory_space<vmem>>, vector<128x128xf32>,
    %c0_i32_6 = arith.constant 0 : i32
    %8 = arith.cmpi eq, %arg0, %c0_i32_6 : i32
    %9 = arith.extui %8 : i1 to i32
    %c0_i32_7 = arith.constant 0 : i32
    %10 = arith.cmpi ne, %9, %c0_i32_7 : i32
    scf.if %10 {
      %c0_8 = arith.constant 0 : index
      %c0_9 = arith.constant 0 : index
      %11 = vector.load %arg3[%c0_8, %c0_9] : memref<128x128xf32, #tpu.memory_space<vmem>>, vector<128x128xf32>
      %cst_10 = arith.constant 4.8828125E-4 : f32
      %12 = vector.broadcast %cst_10 : f32 to vector<128x128xf32>
      %13 = arith.mulf %11, %12 : vector<128x128xf32>
      %c0_11 = arith.constant 0 : index
      %c0_12 = arith.constant 0 : index
      %14 = vector.load %arg2[%c0_11, %c0_12] : memref<128x128xf32, #tpu.memory_space<vmem>>, vector<128x128xf32>
      tpu.vector_store %arg2[%c0_11, %c0_12], %13 {strides = array<i32>} : memref<128x128xf32, #tpu.memory_space<vmem>>, vector<128x128xf32>,
    } else {
    }
    return
  }
  func.func @transform_0(%arg0: i32) -> (i32, i32) {
    %c0_i32 = arith.constant 0 : i32
    %c0_i32_0 = arith.constant 0 : i32
    return %c0_i32, %arg0 : i32, i32
  }
  func.func @transform_1(%arg0: i32) -> (i32, i32) {
    %c0_i32 = arith.constant 0 : i32
    %c0_i32_0 = arith.constant 0 : i32
    %c0_i32_1 = arith.constant 0 : i32
    return %c0_i32, %c0_i32_0 : i32, i32
  }
}

</mosaic_0001>

<llo_original>
// kernel: tpu_custom_call.1
$region0: #{tpu_custom_call.1}
  #allocation0 [shape = 'u32[]', space=smem, size = 0x4, offset = 0x4, fixed_abs, tag = 'smem constant byte address 0x4 - core index']
  #allocation1 [shape = 'u32[144,128]{1,0:T(1,128)}', space=vmem, size = 0x12000, scoped, tag = 'internal scratch']
  #allocation2 [shape = 'f32[128,128]{1,0:T(8,128)}', space=vmem, size = 0x10000, scoped, tag = 'scratch operand']
  %s0 = inlined_call_operand.hbm [shape: f32[128,256], index: 0, kind: input, shape index: {}]
  %s1 = inlined_call_operand.hbm [shape: f32[128,128], index: 1, kind: output, shape index: {}]
  %s2 = sld [smem:[#allocation0]]
  $region26: #{tpu_custom_call.1} parent=0
    _
  %s4 = ssub.s32 1, %s2
  %s5 = scalar_select 0, %s4, %s2
  $region1: #{tpu_custom_call.1} parent=0
    #allocation3 [shape = 'u8[131072]{0}', space=vmem, size = 0x20000, scoped, tag = 'input window, operand 0, single buffered']
    #allocation4 [shape = 's32[1]{0}', space=sflag, size = 0x4, scoped, tag = 'scoped memory for tpu_custom_call.1']
    #allocation5 [shape = 's32[1]{0}', space=sflag, size = 0x4, scoped, tag = 'scoped memory for tpu_custom_call.1']
    #allocation6 [shape = 'u8[65536]{0}', space=vmem, size = 0x10000, scoped, tag = 'output window, operand 0, single buffered']
    %6 = vsyncpa [#allocation4], 0
    %7 = vsyncpa [#allocation5], 0
    // Predicated region
    $region2: #{tpu_custom_call.1} parent=1 // pred_check
      _
    $region3: #{tpu_custom_call.1} parent=1 // pred_check_branch
      %9 = sbr.rel (0) target = $region5
    $region4: #{tpu_custom_call.1} parent=1 // pred_region
      %s11 = ssub.s32 4096, 4096
      %12 = vsyncadd [#allocation4], %s11
      %s13 = sshll.u32 [#allocation3], 4
      %s14 = int_to_ptr.vmem [resolvable:$true] %s13
      %19 = dma.hbm_to_vmem [thread:$0]  %s0, 4096, %s14, [#allocation4], 256, 256, 16
    $region5: #{tpu_custom_call.1} parent=1 // pred_fallthru
      _
    // Predicated region
    $region6: #{tpu_custom_call.1} parent=1 // pred_check
      _
    $region7: #{tpu_custom_call.1} parent=1 // pred_check_branch
      %21 = sbr.rel (0) target = $region9
    $region8: #{tpu_custom_call.1} parent=1 // pred_region
      %22 = dma.done [#allocation4], 4096
    $region9: #{tpu_custom_call.1} parent=1 // pred_fallthru
      _
    %p23 = scmp.eq.s32.totalorder 0, 0
    // Predicated region
    $region10: #{tpu_custom_call.1} parent=1 // pred_check
      %p24 = pneg %p23
    $region11: #{tpu_custom_call.1} parent=1 // pred_check_branch
      %26 = sbr.rel (%p24) target = $region13
    $region12: #{tpu_custom_call.1} parent=1 // pred_region
      %27 = vst [vmem:[#allocation2] sm:$0xff] 0.0
      %28 = vst [vmem:[#allocation2 + $0x8] sm:$0xff] 0.0
      %29 = vst [vmem:[#allocation2 + $0x10] sm:$0xff] 0.0
      %30 = vst [vmem:[#allocation2 + $0x18] sm:$0xff] 0.0
      %31 = vst [vmem:[#allocation2 + $0x20] sm:$0xff] 0.0
      %32 = vst [vmem:[#allocation2 + $0x28] sm:$0xff] 0.0
      %33 = vst [vmem:[#allocation2 + $0x30] sm:$0xff] 0.0
      %34 = vst [vmem:[#allocation2 + $0x38] sm:$0xff] 0.0
      %35 = vst [vmem:[#allocation2 + $0x40] sm:$0xff] 0.0
      %36 = vst [vmem:[#allocation2 + $0x48] sm:$0xff] 0.0
      %37 = vst [vmem:[#allocation2 + $0x50] sm:$0xff] 0.0
      %38 = vst [vmem:[#allocation2 + $0x58] sm:$0xff] 0.0
      %39 = vst [vmem:[#allocation2 + $0x60] sm:$0xff] 0.0
      %40 = vst [vmem:[#allocation2 + $0x68] sm:$0xff] 0.0
      %41 = vst [vmem:[#allocation2 + $0x70] sm:$0xff] 0.0
      %42 = vst [vmem:[#allocation2 + $0x78] sm:$0xff] 0.0
    $region13: #{tpu_custom_call.1} parent=1 // pred_fallthru
      _
    %v43 = vld [vmem:[#allocation3] sm:$0xff]
    %v44 = vld [vmem:[#allocation3 + $0x8] sm:$0xff]
    %v45 = vld [vmem:[#allocation3 + $0x10] sm:$0xff]
    %v46 = vld [vmem:[#allocation3 + $0x18] sm:$0xff]
    %v47 = vld [vmem:[#allocation3 + $0x20] sm:$0xff]
    %v48 = vld [vmem:[#allocation3 + $0x28] sm:$0xff]
    %v49 = vld [vmem:[#allocation3 + $0x30] sm:$0xff]
    %v50 = vld [vmem:[#allocation3 + $0x38] sm:$0xff]
    %v51 = vld [vmem:[#allocation3 + $0x40] sm:$0xff]
    %v52 = vld [vmem:[#allocation3 + $0x48] sm:$0xff]
    %v53 = vld [vmem:[#allocation3 + $0x50] sm:$0xff]
    %v54 = vld [vmem:[#allocation3 + $0x58] sm:$0xff]
    %v55 = vld [vmem:[#allocation3 + $0x60] sm:$0xff]
    %v56 = vld [vmem:[#allocation3 + $0x68] sm:$0xff]
    %v57 = vld [vmem:[#allocation3 + $0x70] sm:$0xff]
    %v58 = vld [vmem:[#allocation3 + $0x78] sm:$0xff]
    %v59 = vld [vmem:[#allocation3 + $0x80] sm:$0xff]
    %v60 = vld [vmem:[#allocation3 + $0x88] sm:$0xff]
    %v61 = vld [vmem:[#allocation3 + $0x90] sm:$0xff]
    %v62 = vld [vmem:[#allocation3 + $0x98] sm:$0xff]
    %v63 = vld [vmem:[#allocation3 + $0xa0] sm:$0xff]
    %v64 = vld [vmem:[#allocation3 + $0xa8] sm:$0xff]
    %v65 = vld [vmem:[#allocation3 + $0xb0] sm:$0xff]
    %v66 = vld [vmem:[#allocation3 + $0xb8] sm:$0xff]
    %v67 = vld [vmem:[#allocation3 + $0xc0] sm:$0xff]
    %v68 = vld [vmem:[#allocation3 + $0xc8] sm:$0xff]
    %v69 = vld [vmem:[#allocation3 + $0xd0] sm:$0xff]
    %v70 = vld [vmem:[#allocation3 + $0xd8] sm:$0xff]
    %v71 = vld [vmem:[#allocation3 + $0xe0] sm:$0xff]
    %v72 = vld [vmem:[#allocation3 + $0xe8] sm:$0xff]
    %v73 = vld [vmem:[#allocation3 + $0xf0] sm:$0xff]
    %v74 = vld [vmem:[#allocation3 + $0xf8] sm:$0xff]
    %v75 = vld [vmem:[#allocation2] sm:$0xff]
    %v76 = vld [vmem:[#allocation2 + $0x8] sm:$0xff]
    %v77 = vld [vmem:[#allocation2 + $0x10] sm:$0xff]
    %v78 = vld [vmem:[#allocation2 + $0x18] sm:$0xff]
    %v79 = vld [vmem:[#allocation2 + $0x20] sm:$0xff]
    %v80 = vld [vmem:[#allocation2 + $0x28] sm:$0xff]
    %v81 = vld [vmem:[#allocation2 + $0x30] sm:$0xff]
    %v82 = vld [vmem:[#allocation2 + $0x38] sm:$0xff]
    %v83 = vld [vmem:[#allocation2 + $0x40] sm:$0xff]
    %v84 = vld [vmem:[#allocation2 + $0x48] sm:$0xff]
    %v85 = vld [vmem:[#allocation2 + $0x50] sm:$0xff]
    %v86 = vld [vmem:[#allocation2 + $0x58] sm:$0xff]
    %v87 = vld [vmem:[#allocation2 + $0x60] sm:$0xff]
    %v88 = vld [vmem:[#allocation2 + $0x68] sm:$0xff]
    %v89 = vld [vmem:[#allocation2 + $0x70] sm:$0xff]
    %v90 = vld [vmem:[#allocation2 + $0x78] sm:$0xff]
    %91 = vmatprep.subr.mxu0 %v44
    %92 = vmatpush1.xpose.msra.mxu0 %v43
    %93 = vmatprep.subr.mxu0 %v46
    %94 = vmatpush1.xpose.msra.mxu0 %v45
    %95 = vmatprep.subr.mxu0 %v48
    %96 = vmatpush1.xpose.msra.mxu0 %v47
    %97 = vmatprep.subr.mxu0 %v50
    %98 = vmatpush1.xpose.msra.mxu0 %v49
    %99 = vmatprep.subr.mxu0 %v52
    %100 = vmatpush1.xpose.msra.mxu0 %v51
    %101 = vmatprep.subr.mxu0 %v54
    %102 = vmatpush1.xpose.msra.mxu0 %v53
    %103 = vmatprep.subr.mxu0 %v56
    %104 = vmatpush1.xpose.msra.mxu0 %v55
    %105 = vmatprep.subr.mxu0 %v58
    %106 = vmatpush1.xpose.msra.mxu0 %v57
    %107 = vmatprep.subr.mxu0 %v60
    %108 = vmatpush1.xpose.msra.mxu0 %v59
    %109 = vmatprep.subr.mxu0 %v62
    %110 = vmatpush1.xpose.msra.mxu0 %v61
    %111 = vmatprep.subr.mxu0 %v64
    %112 = vmatpush1.xpose.msra.mxu0 %v63
    %113 = vmatprep.subr.mxu0 %v66
    %114 = vmatpush1.xpose.msra.mxu0 %v65
    %115 = vmatprep.subr.mxu0 %v68
    %116 = vmatpush1.xpose.msra.mxu0 %v67
    %117 = vmatprep.subr.mxu0 %v70
    %118 = vmatpush1.xpose.msra.mxu0 %v69
    %119 = vmatprep.subr.mxu0 %v72
    %120 = vmatpush1.xpose.msra.mxu0 %v71
    %121 = vmatprep.subr.mxu0 %v74
    %122 = vmatpush1.xpose.msra.mxu0 %v73
    %123 = vmatprep.subr.mxu0 0.0
    %124 = vmatpush1.xpose.msra.mxu0 0.0
    %125 = vmatprep.subr.mxu0 0.0
    %126 = vmatpush1.xpose.msra.mxu0 0.0
    %127 = vmatprep.subr.mxu0 0.0
    %128 = vmatpush1.xpose.msra.mxu0 0.0
    %129 = vmatprep.subr.mxu0 0.0
    %130 = vmatpush1.xpose.msra.mxu0 0.0
    %131 = vmatprep.subr.mxu0 0.0
    %132 = vmatpush1.xpose.msra.mxu0 0.0
    %133 = vmatprep.subr.mxu0 0.0
    %134 = vmatpush1.xpose.msra.mxu0 0.0
    %135 = vmatprep.subr.mxu0 0.0
    %136 = vmatpush1.xpose.msra.mxu0 0.0
    %137 = vmatprep.subr.mxu0 0.0
    %138 = vmatpush1.xpose.msra.mxu0 0.0
    %139 = vmatprep.subr.mxu0 0.0
    %140 = vmatpush1.xpose.msra.mxu0 0.0
    %141 = vmatprep.subr.mxu0 0.0
    %142 = vmatpush1.xpose.msra.mxu0 0.0
    %143 = vmatprep.subr.mxu0 0.0
    %144 = vmatpush1.xpose.msra.mxu0 0.0
    %145 = vmatprep.subr.mxu0 0.0
    %146 = vmatpush1.xpose.msra.mxu0 0.0
    %147 = vmatprep.subr.mxu0 0.0
    %148 = vmatpush1.xpose.msra.mxu0 0.0
    %149 = vmatprep.subr.mxu0 0.0
    %150 = vmatpush1.xpose.msra.mxu0 0.0
    %151 = vmatprep.subr.mxu0 0.0
    %152 = vmatpush1.xpose.msra.mxu0 0.0
    %153 = vmatprep.subr.mxu0 0.0
    %154 = vmatpush1.xpose.msra.mxu0 0.0
    %155 = vmatprep.mubr.f32.mxu0 %v44
    %156 = vmatmul.mubr.f32.gmra.mrb[0].mxu0 %v43
    %v157 = vpop.f32.mrb[0].mxu0
    %v158 = vadd.f32 0.0, %v157
    %v159 = vpop.f32.mrb[0].mxu0
    %160 = vmatprep.mubr.f32.mxu0 %v46
    %161 = vmatmul.mubr.f32.gmra.mrb[0].mxu0 %v45
    %v162 = vpop.f32.mrb[0].mxu0
    %v163 = vadd.f32 0.0, %v162
    %v164 = vpop.f32.mrb[0].mxu0
    %165 = vmatprep.mubr.f32.mxu0 %v48
    %166 = vmatmul.mubr.f32.gmra.mrb[0].mxu0 %v47
    %v167 = vpop.f32.mrb[0].mxu0
    %v168 = vadd.f32 0.0, %v167
    %v169 = vpop.f32.mrb[0].mxu0
    %170 = vmatprep.mubr.f32.mxu0 %v50
    %171 = vmatmul.mubr.f32.gmra.mrb[0].mxu0 %v49
    %v172 = vpop.f32.mrb[0].mxu0
    %v173 = vadd.f32 0.0, %v172
    %v174 = vpop.f32.mrb[0].mxu0
    %175 = vmatprep.mubr.f32.mxu0 %v52
    %176 = vmatmul.mubr.f32.gmra.mrb[0].mxu0 %v51
    %v177 = vpop.f32.mrb[0].mxu0
    %v178 = vadd.f32 0.0, %v177
    %v179 = vpop.f32.mrb[0].mxu0
    %180 = vmatprep.mubr.f32.mxu0 %v54
    %181 = vmatmul.mubr.f32.gmra.mrb[0].mxu0 %v53
    %v182 = vpop.f32.mrb[0].mxu0
    %v183 = vadd.f32 0.0, %v182
    %v184 = vpop.f32.mrb[0].mxu0
    %185 = vmatprep.mubr.f32.mxu0 %v56
    %186 = vmatmul.mubr.f32.gmra.mrb[0].mxu0 %v55
    %v187 = vpop.f32.mrb[0].mxu0
    %v188 = vadd.f32 0.0, %v187
    %v189 = vpop.f32.mrb[0].mxu0
    %190 = vmatprep.mubr.f32.mxu0 %v58
    %191 = vmatmul.mubr.f32.gmra.mrb[0].mxu0 %v57
    %v192 = vpop.f32.mrb[0].mxu0
    %v193 = vadd.f32 0.0, %v192
    %v194 = vpop.f32.mrb[0].mxu0
    %195 = vmatprep.mubr.f32.mxu0 %v60
    %196 = vmatmul.mubr.f32.gmra.mrb[0].mxu0 %v59
    %v197 = vpop.f32.mrb[0].mxu0
    %v198 = vadd.f32 0.0, %v197
    %v199 = vpop.f32.mrb[0].mxu0
    %200 = vmatprep.mubr.f32.mxu0 %v62
    %201 = vmatmul.mubr.f32.gmra.mrb[0].mxu0 %v61
    %v202 = vpop.f32.mrb[0].mxu0
    %v203 = vadd.f32 0.0, %v202
    %v204 = vpop.f32.mrb[0].mxu0
    %205 = vmatprep.mubr.f32.mxu0 %v64
    %206 = vmatmul.mubr.f32.gmra.mrb[0].mxu0 %v63
    %v207 = vpop.f32.mrb[0].mxu0
    %v208 = vadd.f32 0.0, %v207
    %v209 = vpop.f32.mrb[0].mxu0
    %210 = vmatprep.mubr.f32.mxu0 %v66
    %211 = vmatmul.mubr.f32.gmra.mrb[0].mxu0 %v65
    %v212 = vpop.f32.mrb[0].mxu0
    %v213 = vadd.f32 0.0, %v212
    %v214 = vpop.f32.mrb[0].mxu0
    %215 = vmatprep.mubr.f32.mxu0 %v68
    %216 = vmatmul.mubr.f32.gmra.mrb[0].mxu0 %v67
    %v217 = vpop.f32.mrb[0].mxu0
    %v218 = vadd.f32 0.0, %v217
    %v219 = vpop.f32.mrb[0].mxu0
    %220 = vmatprep.mubr.f32.mxu0 %v70
    %221 = vmatmul.mubr.f32.gmra.mrb[0].mxu0 %v69
    %v222 = vpop.f32.mrb[0].mxu0
    %v223 = vadd.f32 0.0, %v222
    %v224 = vpop.f32.mrb[0].mxu0
    %225 = vmatprep.mubr.f32.mxu0 %v72
    %226 = vmatmul.mubr.f32.gmra.mrb[0].mxu0 %v71
    %v227 = vpop.f32.mrb[0].mxu0
    %v228 = vadd.f32 0.0, %v227
    %v229 = vpop.f32.mrb[0].mxu0
    %230 = vmatprep.mubr.f32.mxu0 %v74
    %231 = vmatmul.mubr.f32.gmra.mrb[0].mxu0 %v73
    %v232 = vpop.f32.mrb[0].mxu0
    %v233 = vadd.f32 0.0, %v232
    %v234 = vpop.f32.mrb[0].mxu0
    %235 = vdwg.mxu0
    %v236 = vadd.f32 %v75, %v158
    %v237 = vadd.f32 %v76, %v163
    %v238 = vadd.f32 %v77, %v168
    %v239 = vadd.f32 %v78, %v173
    %v240 = vadd.f32 %v79, %v178
    %v241 = vadd.f32 %v80, %v183
    %v242 = vadd.f32 %v81, %v188
    %v243 = vadd.f32 %v82, %v193
    %v244 = vadd.f32 %v83, %v198
    %v245 = vadd.f32 %v84, %v203
    %v246 = vadd.f32 %v85, %v208
    %v247 = vadd.f32 %v86, %v213
    %v248 = vadd.f32 %v87, %v218
    %v249 = vadd.f32 %v88, %v223
    %v250 = vadd.f32 %v89, %v228
    %v251 = vadd.f32 %v90, %v233
    %252 = vst [vmem:[#allocation2] sm:$0xff] %v236
    %253 = vst [vmem:[#allocation2 + $0x8] sm:$0xff] %v237
    %254 = vst [vmem:[#allocation2 + $0x10] sm:$0xff] %v238
    %255 = vst [vmem:[#allocation2 + $0x18] sm:$0xff] %v239
    %256 = vst [vmem:[#allocation2 + $0x20] sm:$0xff] %v240
    %257 = vst [vmem:[#allocation2 + $0x28] sm:$0xff] %v241
    %258 = vst [vmem:[#allocation2 + $0x30] sm:$0xff] %v242
    %259 = vst [vmem:[#allocation2 + $0x38] sm:$0xff] %v243
    %260 = vst [vmem:[#allocation2 + $0x40] sm:$0xff] %v244
    %261 = vst [vmem:[#allocation2 + $0x48] sm:$0xff] %v245
    %262 = vst [vmem:[#allocation2 + $0x50] sm:$0xff] %v246
    %263 = vst [vmem:[#allocation2 + $0x58] sm:$0xff] %v247
    %264 = vst [vmem:[#allocation2 + $0x60] sm:$0xff] %v248
    %265 = vst [vmem:[#allocation2 + $0x68] sm:$0xff] %v249
    %266 = vst [vmem:[#allocation2 + $0x70] sm:$0xff] %v250
    %267 = vst [vmem:[#allocation2 + $0x78] sm:$0xff] %v251
    // Predicated region
    $region14: #{tpu_custom_call.1} parent=1 // pred_check
      %p268 = pneg %p23
    $region15: #{tpu_custom_call.1} parent=1 // pred_check_branch
      %270 = sbr.rel (%p268) target = $region17
    $region16: #{tpu_custom_call.1} parent=1 // pred_region
      %v271 = vld [vmem:[#allocation2] sm:$0xff]
      %v272 = vld [vmem:[#allocation2 + $0x8] sm:$0xff]
      %v273 = vld [vmem:[#allocation2 + $0x10] sm:$0xff]
      %v274 = vld [vmem:[#allocation2 + $0x18] sm:$0xff]
      %v275 = vld [vmem:[#allocation2 + $0x20] sm:$0xff]
      %v276 = vld [vmem:[#allocation2 + $0x28] sm:$0xff]
      %v277 = vld [vmem:[#allocation2 + $0x30] sm:$0xff]
      %v278 = vld [vmem:[#allocation2 + $0x38] sm:$0xff]
      %v279 = vld [vmem:[#allocation2 + $0x40] sm:$0xff]
      %v280 = vld [vmem:[#allocation2 + $0x48] sm:$0xff]
      %v281 = vld [vmem:[#allocation2 + $0x50] sm:$0xff]
      %v282 = vld [vmem:[#allocation2 + $0x58] sm:$0xff]
      %v283 = vld [vmem:[#allocation2 + $0x60] sm:$0xff]
      %v284 = vld [vmem:[#allocation2 + $0x68] sm:$0xff]
      %v285 = vld [vmem:[#allocation2 + $0x70] sm:$0xff]
      %v286 = vld [vmem:[#allocation2 + $0x78] sm:$0xff]
      %v287 = vmul.f32 %v271, 0.00048828125
      %v288 = vmul.f32 %v272, 0.00048828125
      %v289 = vmul.f32 %v273, 0.00048828125
      %v290 = vmul.f32 %v274, 0.00048828125
      %v291 = vmul.f32 %v275, 0.00048828125
      %v292 = vmul.f32 %v276, 0.00048828125
      %v293 = vmul.f32 %v277, 0.00048828125
      %v294 = vmul.f32 %v278, 0.00048828125
      %v295 = vmul.f32 %v279, 0.00048828125
      %v296 = vmul.f32 %v280, 0.00048828125
      %v297 = vmul.f32 %v281, 0.00048828125
      %v298 = vmul.f32 %v282, 0.00048828125
      %v299 = vmul.f32 %v283, 0.00048828125
      %v300 = vmul.f32 %v284, 0.00048828125
      %v301 = vmul.f32 %v285, 0.00048828125
      %v302 = vmul.f32 %v286, 0.00048828125
      %303 = vst [vmem:[#allocation6] sm:$0xff] %v287
      %304 = vst [vmem:[#allocation6 + $0x8] sm:$0xff] %v288
      %305 = vst [vmem:[#allocation6 + $0x10] sm:$0xff] %v289
      %306 = vst [vmem:[#allocation6 + $0x18] sm:$0xff] %v290
      %307 = vst [vmem:[#allocation6 + $0x20] sm:$0xff] %v291
      %308 = vst [vmem:[#allocation6 + $0x28] sm:$0xff] %v292
      %309 = vst [vmem:[#allocation6 + $0x30] sm:$0xff] %v293
      %310 = vst [vmem:[#allocation6 + $0x38] sm:$0xff] %v294
      %311 = vst [vmem:[#allocation6 + $0x40] sm:$0xff] %v295
      %312 = vst [vmem:[#allocation6 + $0x48] sm:$0xff] %v296
      %313 = vst [vmem:[#allocation6 + $0x50] sm:$0xff] %v297
      %314 = vst [vmem:[#allocation6 + $0x58] sm:$0xff] %v298
      %315 = vst [vmem:[#allocation6 + $0x60] sm:$0xff] %v299
      %316 = vst [vmem:[#allocation6 + $0x68] sm:$0xff] %v300
      %317 = vst [vmem:[#allocation6 + $0x70] sm:$0xff] %v301
      %318 = vst [vmem:[#allocation6 + $0x78] sm:$0xff] %v302
    $region17: #{tpu_custom_call.1} parent=1 // pred_fallthru
      _
    // Predicated region
    $region18: #{tpu_custom_call.1} parent=1 // pred_check
      _
    $region19: #{tpu_custom_call.1} parent=1 // pred_check_branch
      %320 = sbr.rel (0) target = $region21
    $region20: #{tpu_custom_call.1} parent=1 // pred_region
      %s322 = ssub.s32 2048, 2048
      %323 = vsyncadd [#allocation5], %s322
      %s324 = sshll.u32 [#allocation6], 4
      %s325 = int_to_ptr.vmem [resolvable:$true] %s324
      %330 = dma.vmem_to_hbm [thread:$0]  %s325, 2048, %s1, [#allocation5], 128, 128, 8
    $region21: #{tpu_custom_call.1} parent=1 // pred_fallthru
      _
    // Predicated region
    $region22: #{tpu_custom_call.1} parent=1 // pred_check
      _
    $region23: #{tpu_custom_call.1} parent=1 // pred_check_branch
      %332 = sbr.rel (0) target = $region25
    $region24: #{tpu_custom_call.1} parent=1 // pred_region
      %333 = dma.done [#allocation5], 2048
    $region25: #{tpu_custom_call.1} parent=1 // pred_fallthru
      _
    %334 = vsyncpa [#allocation4], 1
    %335 = vsyncpa [#allocation5], 1

</llo_original>
